<compile_context>
chip_gen: v7x
topology: tpu7x:2x2x1
jax: 0.10.0
libtpu: 0.0.40
codegen_flags: <defaults>
</compile_context>

<pallas_src>
import functools

import numpy as np
import jax
import jax.numpy as jnp
from jax.experimental import pallas as pl
from jax.experimental.pallas import tpu as pltpu

WINDOW = 7
PATCH = 4
EMBED = 192
DEPTHS = (2, 2, 18, 2)
HEADS = (3, 6, 12, 24)
MLP_RATIO = 4
LN_EPS = 1e-5
N_TOK = WINDOW * WINDOW      # 49 tokens per window
N_PAD = 56                   # 49 padded up to a sublane multiple
VMEM_LIMIT = 32 * 1024 * 1024
_WEIGHT_TILE_BUDGET = 4 * 1024 * 1024   # per-buffer bf16 weight tile budget


def _round_up(x, m):
    return (x + m - 1) // m * m


def _pick_window_batch(n_windows):
    """Largest of (16, 8, 4, 2, 1) dividing the per-image window count."""
    for cand in (16, 8, 4, 2, 1):
        if n_windows % cand == 0:
            return cand
    return 1


def _pick_tn(K, Np):
    """Largest multiple of 128 dividing Np whose bf16 weight tile fits budget."""
    t = min(Np, 1024)
    while t >= 128:
        if Np % t == 0 and K * t * 2 <= _WEIGHT_TILE_BUDGET:
            return t
        t -= 128
    return 128


# ---------------------------------------------------------------------------
# Pallas kernels
# ---------------------------------------------------------------------------
def _mm_kernel(a_ref, b_ref, bias_ref, o_ref):
    """O = A @ B + bias.  Full-K block, bf16 operands, f32 accumulation."""
    acc = jnp.dot(a_ref[...], b_ref[...], preferred_element_type=jnp.float32)
    o_ref[...] = (acc + bias_ref[...]).astype(o_ref.dtype)


def _mm_res_kernel(a_ref, b_ref, bias_ref, res_ref, o_ref):
    """O = A @ B + bias + residual (fused residual epilogue)."""
    acc = jnp.dot(a_ref[...], b_ref[...], preferred_element_type=jnp.float32)
    o_ref[...] = (acc + bias_ref[...] + res_ref[...]).astype(o_ref.dtype)


def _lnmm_kernel(x_ref, g_ref, bt_ref, w_ref, bias_ref, o_ref):
    """O = LayerNorm(x) @ B + bias.  LN fused as a matmul prologue."""
    x = x_ref[...]
    mu = jnp.mean(x, axis=-1, keepdims=True)
    d = x - mu
    var = jnp.mean(d * d, axis=-1, keepdims=True)
    xn = d * jax.lax.rsqrt(var + LN_EPS) * g_ref[...] + bt_ref[...]
    acc = jnp.dot(xn.astype(jnp.bfloat16), w_ref[...],
                  preferred_element_type=jnp.float32)
    o_ref[...] = (acc + bias_ref[...]).astype(o_ref.dtype)


def _lnmm_mask_kernel(x_ref, m_ref, g_ref, bt_ref, w_ref, bias_ref, o_ref):
    """Like _lnmm_kernel but multiplies the normalized rows by a per-token
    validity mask (spatially padded tokens must be exactly zero post-LN)."""
    x = x_ref[...]
    mu = jnp.mean(x, axis=-1, keepdims=True)
    d = x - mu
    var = jnp.mean(d * d, axis=-1, keepdims=True)
    xn = (d * jax.lax.rsqrt(var + LN_EPS) * g_ref[...] + bt_ref[...]) * m_ref[...]
    acc = jnp.dot(xn.astype(jnp.bfloat16), w_ref[...],
                  preferred_element_type=jnp.float32)
    o_ref[...] = (acc + bias_ref[...]).astype(o_ref.dtype)


def _ln_kernel(x_ref, w_ref, b_ref, o_ref):
    """Standalone LayerNorm over the last axis (eps = 1e-5)."""
    x = x_ref[...]
    mu = jnp.mean(x, axis=-1, keepdims=True)
    d = x - mu
    var = jnp.mean(d * d, axis=-1, keepdims=True)
    y = d * jax.lax.rsqrt(var + LN_EPS)
    o_ref[...] = (y * w_ref[...] + b_ref[...]).astype(o_ref.dtype)


def _attn_kernel(q_ref, k_ref, v_ref, bias_ref, mask_ref, o_ref, *, scale, n_heads):
    """Window attention for a batch of windows (all heads), lane-dense output."""
    q = q_ref[...]                                     # (WB, nH, NP, hd) bf16
    k = k_ref[...]
    v = v_ref[...]
    attn = jnp.einsum('bhnd,bhmd->bhnm', q, k,
                      preferred_element_type=jnp.float32)
    attn = attn * scale + bias_ref[...][None] + mask_ref[...][:, None]
    m = jnp.max(attn, axis=-1, keepdims=True)
    p = jnp.exp(attn - m)
    denom = jnp.sum(p, axis=-1, keepdims=True)
    p = p * pl.reciprocal(denom, approx=True)
    out = jnp.einsum('bhnm,bhmd->bhnd', p.astype(jnp.bfloat16), v,
                     preferred_element_type=jnp.float32)  # (WB, nH, NP, hd)
    # Merge heads inside the kernel so the HBM store is lane-dense (WB, NP, C).
    merged = jnp.concatenate([out[:, h] for h in range(n_heads)], axis=-1)
    o_ref[...] = merged.astype(o_ref.dtype)


# ---------------------------------------------------------------------------
# Kernel wrappers
# ---------------------------------------------------------------------------
def linear(x, lin, n_out, residual=None, out_dtype=jnp.float32):
    """y = x @ W + b (+ residual).  lin['w'] is pre-transposed/padded (K, Np)
    bf16, lin['b'] is (1, Np) f32.  Only the M axis of the activation is padded."""
    lead = x.shape[:-1]
    K = x.shape[-1]
    x2 = x.reshape(-1, K).astype(jnp.bfloat16)
    M = x2.shape[0]
    w, b = lin['w'], lin['b']
    Np = w.shape[1]
    tm = 256 if M > 128 else 128
    tn = _pick_tn(K, Np)
    Mp = _round_up(M, tm)
    if Mp != M:
        x2 = jnp.pad(x2, ((0, Mp - M), (0, 0)))

    args = [x2, w, b]
    in_specs = [
        pl.BlockSpec((tm, K), lambda i, j: (i, 0)),
        pl.BlockSpec((K, tn), lambda i, j: (0, j)),
        pl.BlockSpec((1, tn), lambda i, j: (0, j)),
    ]
    if residual is None:
        kernel = _mm_kernel
    else:
        r2 = residual.reshape(-1, residual.shape[-1]).astype(jnp.float32)
        r2 = jnp.pad(r2, ((0, Mp - M), (0, Np - r2.shape[1])))
        args.append(r2)
        in_specs.append(pl.BlockSpec((tm, tn), lambda i, j: (i, j)))
        kernel = _mm_res_kernel

    y = pl.pallas_call(
        kernel,
        out_shape=jax.ShapeDtypeStruct((Mp, Np), out_dtype),
        grid=(Mp // tm, Np // tn),
        in_specs=in_specs,
        out_specs=pl.BlockSpec((tm, tn), lambda i, j: (i, j)),
        compiler_params=pltpu.CompilerParams(
            dimension_semantics=("parallel", "parallel"),
            vmem_limit_bytes=VMEM_LIMIT),
    )(*args)
    return y[:M, :n_out].reshape(lead + (n_out,))


def linear_ln(x, ln_w, ln_b, lin, n_out, token_mask=None, out_dtype=jnp.float32):
    """y = LayerNorm(x) @ W + b, with the LN fused into the matmul prologue.
    Optional token_mask (..., 1) zeroes normalized rows of padded tokens."""
    lead = x.shape[:-1]
    K = x.shape[-1]
    x2 = x.reshape(-1, K).astype(jnp.float32)
    M = x2.shape[0]
    w, b = lin['w'], lin['b']
    Np = w.shape[1]
    tm = 256 if M > 128 else 128
    tn = _pick_tn(K, Np)
    Mp = _round_up(M, tm)
    if Mp != M:
        x2 = jnp.pad(x2, ((0, Mp - M), (0, 0)))

    g = ln_w.reshape(1, K).astype(jnp.float32)
    bt = ln_b.reshape(1, K).astype(jnp.float32)

    if token_mask is None:
        kernel = _lnmm_kernel
        args = [x2, g, bt, w, b]
        in_specs = [
            pl.BlockSpec((tm, K), lambda i, j: (i, 0)),
            pl.BlockSpec((1, K), lambda i, j: (0, 0)),
            pl.BlockSpec((1, K), lambda i, j: (0, 0)),
            pl.BlockSpec((K, tn), lambda i, j: (0, j)),
            pl.BlockSpec((1, tn), lambda i, j: (0, j)),
        ]
    else:
        m2 = token_mask.reshape(-1, 1).astype(jnp.float32)
        if Mp != M:
            m2 = jnp.pad(m2, ((0, Mp - M), (0, 0)))
        kernel = _lnmm_mask_kernel
        args = [x2, m2, g, bt, w, b]
        in_specs = [
            pl.BlockSpec((tm, K), lambda i, j: (i, 0)),
            pl.BlockSpec((tm, 1), lambda i, j: (i, 0)),
            pl.BlockSpec((1, K), lambda i, j: (0, 0)),
            pl.BlockSpec((1, K), lambda i, j: (0, 0)),
            pl.BlockSpec((K, tn), lambda i, j: (0, j)),
            pl.BlockSpec((1, tn), lambda i, j: (0, j)),
        ]

    y = pl.pallas_call(
        kernel,
        out_shape=jax.ShapeDtypeStruct((Mp, Np), out_dtype),
        grid=(Mp // tm, Np // tn),
        in_specs=in_specs,
        out_specs=pl.BlockSpec((tm, tn), lambda i, j: (i, j)),
        compiler_params=pltpu.CompilerParams(
            dimension_semantics=("parallel", "parallel"),
            vmem_limit_bytes=VMEM_LIMIT),
    )(*args)
    return y[:M, :n_out].reshape(lead + (n_out,))


def layernorm(x, w, b):
    s = x.shape
    C = s[-1]
    x2 = x.reshape(-1, C).astype(jnp.float32)
    M = x2.shape[0]
    # Large, memory-bound-friendly row tile bounded by ~2 MiB per block.
    tm = max(8, min(512, (2 * 1024 * 1024) // (C * 4)) // 8 * 8)
    tm = min(tm, _round_up(M, 8))
    Mp = _round_up(M, tm)
    if Mp != M:
        x2 = jnp.pad(x2, ((0, Mp - M), (0, 0)))
    y = pl.pallas_call(
        _ln_kernel,
        out_shape=jax.ShapeDtypeStruct((Mp, C), jnp.float32),
        grid=(Mp // tm,),
        in_specs=[
            pl.BlockSpec((tm, C), lambda i: (i, 0)),
            pl.BlockSpec((1, C), lambda i: (0, 0)),
            pl.BlockSpec((1, C), lambda i: (0, 0)),
        ],
        out_specs=pl.BlockSpec((tm, C), lambda i: (i, 0)),
        compiler_params=pltpu.CompilerParams(
            dimension_semantics=("parallel",),
            vmem_limit_bytes=VMEM_LIMIT),
    )(x2, w.reshape(1, C), b.reshape(1, C))
    return y[:M].reshape(s)


def _attn_call(q, k, v, bias, mask, wb, n_windows, scale):
    Bw, nH, NP, hd = q.shape
    C = nH * hd
    groups = Bw // wb
    mask_groups = max(1, n_windows // wb)
    kernel = functools.partial(_attn_kernel, scale=scale, n_heads=nH)
    return pl.pallas_call(
        kernel,
        out_shape=jax.ShapeDtypeStruct((Bw, NP, C), jnp.bfloat16),
        grid=(groups,),
        in_specs=[
            pl.BlockSpec((wb, nH, NP, hd), lambda g: (g, 0, 0, 0)),
            pl.BlockSpec((wb, nH, NP, hd), lambda g: (g, 0, 0, 0)),
            pl.BlockSpec((wb, nH, NP, hd), lambda g: (g, 0, 0, 0)),
            pl.BlockSpec((nH, NP, NP), lambda g: (0, 0, 0)),
            pl.BlockSpec((wb, NP, NP), lambda g: (g % mask_groups, 0, 0)),
        ],
        out_specs=pl.BlockSpec((wb, NP, C), lambda g: (g, 0, 0)),
        compiler_params=pltpu.CompilerParams(
            dimension_semantics=("parallel",),
            vmem_limit_bytes=VMEM_LIMIT),
    )(q, k, v, bias, mask)


# ---------------------------------------------------------------------------
# Swin components
# ---------------------------------------------------------------------------
def _rel_pos_index(ws):
    coords = np.stack(np.meshgrid(np.arange(ws), np.arange(ws), indexing='ij'))
    cf = coords.reshape(2, -1)
    rel = cf[:, :, None] - cf[:, None, :]
    rel = rel.transpose(1, 2, 0).astype(np.int64)
    rel[:, :, 0] += ws - 1
    rel[:, :, 1] += ws - 1
    rel[:, :, 0] *= 2 * ws - 1
    return rel.sum(-1)                      # (ws*ws, ws*ws)


REL_INDEX = _rel_pos_index(WINDOW)
_MASK_CACHE = {}


def _stage_masks(Hp, Wp):
    """Additive attention masks (nW, 56, 56) for (no-shift, shift) blocks."""
    key = (Hp, Wp)
    if key in _MASK_CACHE:
        return _MASK_CACHE[key]
    ws, shift = WINDOW, WINDOW // 2
    n_windows = (Hp // ws) * (Wp // ws)

    base = np.zeros((N_PAD, N_PAD), np.float32)
    base[:, N_TOK:] = -1e9                   # padded key columns (49..55)
    no_shift = jnp.asarray(np.tile(base[None], (n_windows, 1, 1)))

    img_mask = np.zeros((1, Hp, Wp, 1), np.float32)
    cnt = 0
    slices = (slice(0, -ws), slice(-ws, -shift), slice(-shift, None))
    for hs in slices:
        for wsl in slices:
            img_mask[:, hs, wsl, :] = cnt
            cnt += 1
    mw = img_mask.reshape(1, Hp // ws, ws, Wp // ws, ws, 1)
    mw = mw.transpose(0, 1, 3, 2, 4, 5).reshape(-1, N_TOK)
    am = mw[:, None, :] - mw[:, :, None]
    am = np.where(am != 0, -100.0, 0.0).astype(np.float32)
    sm = np.tile(base[None], (n_windows, 1, 1))
    sm[:, :N_TOK, :N_TOK] += am
    shifted = jnp.asarray(sm)

    _MASK_CACHE[key] = (no_shift, shifted)
    return no_shift, shifted


def window_attention(blk, xw_raw, tok_mask, nH, mask, wb, n_windows):
    """xw_raw: raw (pre-norm1) window tokens; tok_mask: 1 for valid tokens."""
    Bw, N, C = xw_raw.shape                 # N == 49
    hd = C // nH
    NP = mask.shape[-1]                     # 56
    # norm1 fused into the qkv projection (validity mask keeps padded tokens 0).
    qkv = linear_ln(xw_raw, blk['norm1_w'], blk['norm1_b'], blk['qkv'], 3 * C,
                    token_mask=tok_mask, out_dtype=jnp.bfloat16)   # (Bw, N, 3C)
    qkv = qkv.reshape(Bw, N, 3, nH, hd).transpose(2, 0, 3, 1, 4)   # (3, Bw, nH, N, hd)
    qkv = jnp.pad(qkv, ((0, 0), (0, 0), (0, 0), (0, NP - N), (0, 0)))
    q, k, v = qkv[0], qkv[1], qkv[2]
    out = _attn_call(q, k, v, blk['rel_bias'], mask, wb, n_windows, hd ** -0.5)
    out = out[:, :N, :]                     # (Bw, N, C) bf16
    return linear(out, blk['proj'], C)      # (Bw, N, C) f32


@functools.partial(jax.jit, static_argnums=(2, 3, 4, 5, 7, 8))
def swin_block(blk, x, H, W, nH, shift_size, attn_mask, wb, n_windows):
    B, L, C = x.shape
    ws = WINDOW
    shortcut = x
    xi = x.reshape(B, H, W, C)                       # raw (pre-norm1) tokens
    vm = jnp.ones((B, H, W, 1), jnp.float32)         # token validity mask
    pad_b, pad_r = (-H) % ws, (-W) % ws
    if pad_b or pad_r:
        xi = jnp.pad(xi, ((0, 0), (0, pad_b), (0, pad_r), (0, 0)))
        vm = jnp.pad(vm, ((0, 0), (0, pad_b), (0, pad_r), (0, 0)))
    Hp, Wp = H + pad_b, W + pad_r
    if shift_size > 0:
        xi = jnp.roll(xi, shift=(-shift_size, -shift_size), axis=(1, 2))
        vm = jnp.roll(vm, shift=(-shift_size, -shift_size), axis=(1, 2))
    nWh, nWw = Hp // ws, Wp // ws

    def partition(t):
        c = t.shape[-1]
        t = t.reshape(B, nWh, ws, nWw, ws, c).transpose(0, 1, 3, 2, 4, 5)
        return t.reshape(-1, ws * ws, c)

    xw = partition(xi)
    vw = partition(vm)
    xw = window_attention(blk, xw, vw, nH, attn_mask, wb, n_windows)
    xn = xw.reshape(B, nWh, nWw, ws, ws, C).transpose(0, 1, 3, 2, 4, 5)
    xn = xn.reshape(B, Hp, Wp, C)
    if shift_size > 0:
        xn = jnp.roll(xn, shift=(shift_size, shift_size), axis=(1, 2))
    xn = xn[:, :H, :W, :].reshape(B, H * W, C)
    x = shortcut + xn                                   # attention residual

    # MLP: norm2 fused into fc1, exact-erf GELU in XLA (bf16 HBM traffic),
    # residual fused into fc2.
    y = linear_ln(x, blk['norm2_w'], blk['norm2_b'], blk['fc1'], MLP_RATIO * C,
                  out_dtype=jnp.bfloat16)
    y = jax.nn.gelu(y.astype(jnp.float32), approximate=False).astype(jnp.bfloat16)
    return linear(y, blk['fc2'], C, residual=x)


@functools.partial(jax.jit, static_argnums=(2, 3))
def patch_merging(ds, x, H, W):
    B, L, C = x.shape
    x = x.reshape(B, H, W, C)
    if (H % 2) or (W % 2):
        x = jnp.pad(x, ((0, 0), (0, H % 2), (0, W % 2), (0, 0)))
    x0 = x[:, 0::2, 0::2, :]
    x1 = x[:, 1::2, 0::2, :]
    x2 = x[:, 0::2, 1::2, :]
    x3 = x[:, 1::2, 1::2, :]
    xc = jnp.concatenate([x0, x1, x2, x3], axis=-1).reshape(B, -1, 4 * C)
    # norm fused into the reduction matmul (reference pads BEFORE the norm,
    # so this fusion is exact).
    return linear_ln(xc, ds['norm_w'], ds['norm_b'], ds['red'], 2 * C)


@jax.jit
def patch_embed(pe, x):
    B, C, H, W = x.shape
    Wh, Ww = H // PATCH, W // PATCH
    patches = x.reshape(B, C, Wh, PATCH, Ww, PATCH)
    patches = patches.transpose(0, 2, 4, 1, 3, 5).reshape(
        B * Wh * Ww, C * PATCH * PATCH)
    feat = linear(patches, pe['proj'], EMBED)
    feat = layernorm(feat, pe['norm_w'], pe['norm_b'])
    return feat.reshape(B, Wh * Ww, EMBED)


def basic_layer(stage, x, H, W, nH):
    ws, shift = WINDOW, WINDOW // 2
    Hp, Wp = _round_up(H, ws), _round_up(W, ws)
    n_windows = (Hp // ws) * (Wp // ws)
    wb = _pick_window_batch(n_windows)
    no_shift_mask, shift_mask = _stage_masks(Hp, Wp)

    for j, blk in enumerate(stage['blocks']):
        ss = 0 if j % 2 == 0 else shift
        mask = shift_mask if ss > 0 else no_shift_mask
        x = swin_block(blk, x, H, W, nH, ss, mask, wb, n_windows)

    if stage['downsample'] is not None:
        x_down = patch_merging(stage['downsample'], x, H, W)
        return x, H, W, x_down, (H + 1) // 2, (W + 1) // 2
    return x, H, W, x, H, W


def swin_forward(params, x):
    """x: (B, 3, H, W) NCHW float32 -> tuple of 4 NCHW feature maps."""
    B, C, H, W = x.shape
    pad_h, pad_w = (-H) % PATCH, (-W) % PATCH
    if pad_h or pad_w:
        x = jnp.pad(x, ((0, 0), (0, 0), (0, pad_h), (0, pad_w)))
    Wh, Ww = x.shape[2] // PATCH, x.shape[3] // PATCH
    x_tok = patch_embed(params['patch_embed'], x)

    outs = []
    H_, W_ = Wh, Ww
    for i in range(4):
        dim = EMBED * (2 ** i)
        x_out, Ho, Wo, x_tok, H_, W_ = basic_layer(
            params['stages'][i], x_tok, H_, W_, HEADS[i])
        n = params['norms'][i]
        x_norm = layernorm(x_out, n['w'], n['b'])
        outs.append(x_norm.reshape(B, Ho, Wo, dim).transpose(0, 3, 1, 2))
    return tuple(outs)


# ---------------------------------------------------------------------------
# Parameters: deterministic synthetic init + one-time TPU-friendly prep
# ---------------------------------------------------------------------------
def init_params(seed=0):
    key = jax.random.PRNGKey(seed)
    cnt = [0]

    def nxt():
        cnt[0] += 1
        return jax.random.fold_in(key, cnt[0])

    def tn(shape, std=0.02):
        return std * jax.random.normal(nxt(), shape, jnp.float32)

    zeros = lambda s: jnp.zeros(s, jnp.float32)
    ones = lambda s: jnp.ones(s, jnp.float32)

    params = {
        'patch_embed': dict(w=tn((EMBED, 3, PATCH, PATCH)), b=zeros((EMBED,)),
                            norm_w=ones((EMBED,)), norm_b=zeros((EMBED,))),
        'stages': [],
        'norms': [dict(w=ones((EMBED * 2 ** i,)), b=zeros((EMBED * 2 ** i,)))
                  for i in range(4)],
    }
    for i in range(4):
        dim = EMBED * 2 ** i
        nH = HEADS[i]
        blocks = []
        for _ in range(DEPTHS[i]):
            blocks.append(dict(
                norm1_w=ones((dim,)), norm1_b=zeros((dim,)),
                qkv_w=tn((3 * dim, dim)), qkv_b=zeros((3 * dim,)),
                proj_w=tn((dim, dim)), proj_b=zeros((dim,)),
                rel_bias=tn(((2 * WINDOW - 1) ** 2, nH)),
                norm2_w=ones((dim,)), norm2_b=zeros((dim,)),
                fc1_w=tn((MLP_RATIO * dim, dim)), fc1_b=zeros((MLP_RATIO * dim,)),
                fc2_w=tn((dim, MLP_RATIO * dim)), fc2_b=zeros((dim,)),
            ))
        ds = None
        if i < 3:
            ds = dict(norm_w=ones((4 * dim,)), norm_b=zeros((4 * dim,)),
                      red_w=tn((2 * dim, 4 * dim)))
        params['stages'].append(dict(blocks=blocks, downsample=ds))
    return params


def _prep_linear(w, b):
    """PyTorch (out, in) weight -> pre-transposed (in, Np) bf16 + (1, Np) f32 bias."""
    out, k = w.shape
    np_ = _round_up(out, 128)
    wt = jnp.zeros((k, np_), jnp.bfloat16).at[:, :out].set(
        w.T.astype(jnp.bfloat16))
    bb = jnp.zeros((1, np_), jnp.float32)
    if b is not None:
        bb = bb.at[0, :out].set(b)
    return {'w': wt, 'b': bb}


def prepare_params(raw):
    """One-time prep: transpose/pad weights, cast to bf16, precompute rel bias."""
    pe = raw['patch_embed']
    prepped = {
        'patch_embed': {
            'proj': _prep_linear(pe['w'].reshape(EMBED, -1), pe['b']),
            'norm_w': pe['norm_w'], 'norm_b': pe['norm_b'],
        },
        'stages': [],
        'norms': raw['norms'],
    }
    rel_idx = REL_INDEX.reshape(-1)
    for st in raw['stages']:
        blocks = []
        for blk in st['blocks']:
            nH = blk['rel_bias'].shape[1]
            bias = blk['rel_bias'][rel_idx].reshape(N_TOK, N_TOK, nH)
            bias = bias.transpose(2, 0, 1)                      # (nH, 49, 49)
            bias_p = jnp.zeros((nH, N_PAD, N_PAD), jnp.float32)
            bias_p = bias_p.at[:, :N_TOK, :N_TOK].set(bias)
            blocks.append({
                'norm1_w': blk['norm1_w'], 'norm1_b': blk['norm1_b'],
                'qkv': _prep_linear(blk['qkv_w'], blk['qkv_b']),
                'proj': _prep_linear(blk['proj_w'], blk['proj_b']),
                'rel_bias': bias_p,
                'norm2_w': blk['norm2_w'], 'norm2_b': blk['norm2_b'],
                'fc1': _prep_linear(blk['fc1_w'], blk['fc1_b']),
                'fc2': _prep_linear(blk['fc2_w'], blk['fc2_b']),
            })
        ds = None
        if st['downsample'] is not None:
            d = st['downsample']
            ds = {'norm_w': d['norm_w'], 'norm_b': d['norm_b'],
                  'red': _prep_linear(d['red_w'], None)}
        prepped['stages'].append({'blocks': blocks, 'downsample': ds})
    return prepped


if __name__ == "__main__":
    key = jax.random.PRNGKey(0)
    params = prepare_params(init_params(0))
    x = jax.random.normal(jax.random.fold_in(key, 999), (2, 3, 32, 32), jnp.float32)
    outs = swin_forward(params, x)
    outs = jax.block_until_ready(outs)
    expected = [(2, 192, 8, 8), (2, 384, 4, 4), (2, 768, 2, 2), (2, 1536, 1, 1)]
    assert [tuple(o.shape) for o in outs] == expected, [o.shape for o in outs]
    assert all(bool(jnp.all(jnp.isfinite(o))) for o in outs)
    print("KERNEL_OK")
</pallas_src>

<mosaic_0001>
module attributes {stable_mosaic.version = 11 : i64} {
  func.func @_mm_kernel(%arg0: i32, %arg1: i32, %arg2: memref<128x48xbf16, #tpu.memory_space<vmem>>, %arg3: memref<48x256xbf16, #tpu.memory_space<vmem>>, %arg4: memref<1x256xf32, #tpu.memory_space<vmem>>, %arg5: memref<128x256xf32, #tpu.memory_space<vmem>>) attributes {dimension_semantics = [#tpu.dimension_semantics<parallel>, #tpu.dimension_semantics<parallel>], iteration_bounds = array<i64: 1, 1>, scalar_prefetch = 0 : i64, scratch_operands = 0 : i64, tpu.core_type = #tpu.core_type<tc>, window_params = [{transform_indices = @transform_0, window_bounds = array<i64: 128, 48>}, {transform_indices = @transform_1, window_bounds = array<i64: 48, 256>}, {transform_indices = @transform_2, window_bounds = array<i64: 1, 256>}, {transform_indices = @transform_3, window_bounds = array<i64: 128, 256>}]} {
    %c0 = arith.constant 0 : index
    %c0_0 = arith.constant 0 : index
    %0 = vector.load %arg2[%c0, %c0_0] : memref<128x48xbf16, #tpu.memory_space<vmem>>, vector<128x48xbf16>
    %c0_1 = arith.constant 0 : index
    %c0_2 = arith.constant 0 : index
    %1 = vector.load %arg3[%c0_1, %c0_2] : memref<48x256xbf16, #tpu.memory_space<vmem>>, vector<48x256xbf16>
    %cst = arith.constant dense<0.000000e+00> : vector<128x256xf32>
    %2 = tpu.matmul %0, %1, %cst {dimension_numbers = #tpu.dot_dimension_numbers<[1], [0], [0], [1], [0, 0, 1, 1], [], []>} : vector<128x48xbf16>, vector<48x256xbf16>, vector<128x256xf32> -> vector<128x256xf32>
    %c0_3 = arith.constant 0 : index
    %c0_4 = arith.constant 0 : index
    %3 = vector.load %arg4[%c0_3, %c0_4] : memref<1x256xf32, #tpu.memory_space<vmem>>, vector<1x256xf32>
    %4 = vector.broadcast %3 : vector<1x256xf32> to vector<128x256xf32>
    %5 = arith.addf %2, %4 : vector<128x256xf32>
    %c0_5 = arith.constant 0 : index
    %c0_6 = arith.constant 0 : index
    %6 = vector.load %arg5[%c0_5, %c0_6] : memref<128x256xf32, #tpu.memory_space<vmem>>, vector<128x256xf32>
    tpu.vector_store %arg5[%c0_5, %c0_6], %5 {strides = array<i32>} : memref<128x256xf32, #tpu.memory_space<vmem>>, vector<128x256xf32>,
    return
  }
  func.func @transform_0(%arg0: i32, %arg1: i32) -> (i32, i32) {
    %c0_i32 = arith.constant 0 : i32
    %c0_i32_0 = arith.constant 0 : i32
    return %arg0, %c0_i32 : i32, i32
  }
  func.func @transform_1(%arg0: i32, %arg1: i32) -> (i32, i32) {
    %c0_i32 = arith.constant 0 : i32
    %c0_i32_0 = arith.constant 0 : i32
    return %c0_i32, %arg1 : i32, i32
  }
  func.func @transform_2(%arg0: i32, %arg1: i32) -> (i32, i32) {
    %c0_i32 = arith.constant 0 : i32
    %c0_i32_0 = arith.constant 0 : i32
    return %c0_i32, %arg1 : i32, i32
  }
  func.func @transform_3(%arg0: i32, %arg1: i32) -> (i32, i32) {
    %c0_i32 = arith.constant 0 : i32
    return %arg0, %arg1 : i32, i32
  }
}

module attributes {stable_mosaic.version = 11 : i64} {
  func.func @_ln_kernel(%arg0: i32, %arg1: memref<128x192xf32, #tpu.memory_space<vmem>>, %arg2: memref<1x192xf32, #tpu.memory_space<vmem>>, %arg3: memref<1x192xf32, #tpu.memory_space<vmem>>, %arg4: memref<128x192xf32, #tpu.memory_space<vmem>>) attributes {dimension_semantics = [#tpu.dimension_semantics<parallel>], iteration_bounds = array<i64: 1>, scalar_prefetch = 0 : i64, scratch_operands = 0 : i64, tpu.core_type = #tpu.core_type<tc>, window_params = [{transform_indices = @transform_0, window_bounds = array<i64: 128, 192>}, {pipeline_mode = #tpu.pipeline_mode<synchronous>, transform_indices = @transform_1, window_bounds = array<i64: 1, 192>}, {pipeline_mode = #tpu.pipeline_mode<synchronous>, transform_indices = @transform_2, window_bounds = array<i64: 1, 192>}, {transform_indices = @transform_3, window_bounds = array<i64: 128, 192>}]} {
    %c0 = arith.constant 0 : index
    %c0_0 = arith.constant 0 : index
    %0 = vector.load %arg1[%c0, %c0_0] : memref<128x192xf32, #tpu.memory_space<vmem>>, vector<128x192xf32>
    %cst = arith.constant dense<0.000000e+00> : vector<128xf32>
    %1 = vector.multi_reduction <add>, %0, %cst [1] : vector<128x192xf32> to vector<128xf32>
    %2 = vector.shape_cast %1 : vector<128xf32> to vector<128x1xf32>
    %cst_1 = arith.constant 1.920000e+02 : f32
    %3 = vector.broadcast %cst_1 : f32 to vector<128x1xf32>
    %4 = arith.divf %2, %3 : vector<128x1xf32>
    %5 = vector.broadcast %4 : vector<128x1xf32> to vector<128x192xf32>
    %6 = arith.subf %0, %5 : vector<128x192xf32>
    %7 = arith.mulf %6, %6 : vector<128x192xf32>
    %cst_2 = arith.constant dense<0.000000e+00> : vector<128xf32>
    %8 = vector.multi_reduction <add>, %7, %cst_2 [1] : vector<128x192xf32> to vector<128xf32>
    %9 = vector.shape_cast %8 : vector<128xf32> to vector<128x1xf32>
    %cst_3 = arith.constant 1.920000e+02 : f32
    %10 = vector.broadcast %cst_3 : f32 to vector<128x1xf32>
    %11 = arith.divf %9, %10 : vector<128x1xf32>
    %cst_4 = arith.constant 9.99999974E-6 : f32
    %12 = vector.broadcast %cst_4 : f32 to vector<128x1xf32>
    %13 = arith.addf %11, %12 : vector<128x1xf32>
    %14 = math.rsqrt %13 : vector<128x1xf32>
    %15 = vector.broadcast %14 : vector<128x1xf32> to vector<128x192xf32>
    %16 = arith.mulf %6, %15 : vector<128x192xf32>
    %c0_5 = arith.constant 0 : index
    %c0_6 = arith.constant 0 : index
    %17 = vector.load %arg2[%c0_5, %c0_6] : memref<1x192xf32, #tpu.memory_space<vmem>>, vector<1x192xf32>
    %18 = vector.broadcast %17 : vector<1x192xf32> to vector<128x192xf32>
    %19 = arith.mulf %16, %18 : vector<128x192xf32>
    %c0_7 = arith.constant 0 : index
    %c0_8 = arith.constant 0 : index
    %20 = vector.load %arg3[%c0_7, %c0_8] : memref<1x192xf32, #tpu.memory_space<vmem>>, vector<1x192xf32>
    %21 = vector.broadcast %20 : vector<1x192xf32> to vector<128x192xf32>
    %22 = arith.addf %19, %21 : vector<128x192xf32>
    %c0_9 = arith.constant 0 : index
    %c0_10 = arith.constant 0 : index
    %23 = vector.load %arg4[%c0_9, %c0_10] : memref<128x192xf32, #tpu.memory_space<vmem>>, vector<128x192xf32>
    tpu.vector_store %arg4[%c0_9, %c0_10], %22 {strides = array<i32>} : memref<128x192xf32, #tpu.memory_space<vmem>>, vector<128x192xf32>,
    return
  }
  func.func @transform_0(%arg0: i32) -> (i32, i32) {
    %c0_i32 = arith.constant 0 : i32
    %c0_i32_0 = arith.constant 0 : i32
    return %arg0, %c0_i32 : i32, i32
  }
  func.func @transform_1(%arg0: i32) -> (i32, i32) {
    %c0_i32 = arith.constant 0 : i32
    %c0_i32_0 = arith.constant 0 : i32
    %c0_i32_1 = arith.constant 0 : i32
    return %c0_i32, %c0_i32_0 : i32, i32
  }
  func.func @transform_2(%arg0: i32) -> (i32, i32) {
    %c0_i32 = arith.constant 0 : i32
    %c0_i32_0 = arith.constant 0 : i32
    %c0_i32_1 = arith.constant 0 : i32
    return %c0_i32, %c0_i32_0 : i32, i32
  }
  func.func @transform_3(%arg0: i32) -> (i32, i32) {
    %c0_i32 = arith.constant 0 : i32
    %c0_i32_0 = arith.constant 0 : i32
    return %arg0, %c0_i32 : i32, i32
  }
}

</mosaic_0001>

<llo_original>
// kernel: patch_embed.3
$region0: #{patch_embed.3}
  #allocation0 [shape = 'u32[]', space=smem, size = 0x4, offset = 0x4, fixed_abs, tag = 'smem constant byte address 0x4 - core index']
  #allocation1 [shape = 'u32[144,128]{1,0:T(1,128)}', space=vmem, size = 0x12000, scoped, tag = 'internal scratch']
  %s0 = inlined_call_operand.vmem [shape: f32[128,192], index: 0, kind: input, shape index: {}]
  %s1 = inlined_call_operand.vmem [shape: f32[1,192], index: 1, kind: input, shape index: {}]
  %s2 = inlined_call_operand.vmem [shape: f32[1,192], index: 2, kind: input, shape index: {}]
  %s3 = inlined_call_operand.hbm [shape: f32[128,192], index: 3, kind: output, shape index: {}]
  %s4 = sld [smem:[#allocation0]]
  $region22: #{patch_embed.3} parent=0
    _
  %s6 = ssub.s32 1, %s4
  %s7 = scalar_select 0, %s6, %s4
  $region1: #{patch_embed.3} parent=0
    #allocation2 [shape = 'u8[131072]{0}', space=vmem, size = 0x20000, scoped, tag = 'output window, operand 0, single buffered']
    #allocation3 [shape = 's32[1]{0}', space=sflag, size = 0x4, scoped, tag = 'scoped memory for patch_embed.3']
    %8 = vsyncpa [#allocation3], 0
    // Predicated region
    $region2: #{patch_embed.3} parent=1 // pred_check
      _
    $region3: #{patch_embed.3} parent=1 // pred_check_branch
      %10 = sbr.rel (0) target = $region5
    $region4: #{patch_embed.3} parent=1 // pred_region
      _
    $region5: #{patch_embed.3} parent=1 // pred_fallthru
      _
    // Predicated region
    $region6: #{patch_embed.3} parent=1 // pred_check
      _
    $region7: #{patch_embed.3} parent=1 // pred_check_branch
      %12 = sbr.rel (0) target = $region9
    $region8: #{patch_embed.3} parent=1 // pred_region
      _
    $region9: #{patch_embed.3} parent=1 // pred_fallthru
      _
    // Predicated region
    $region10: #{patch_embed.3} parent=1 // pred_check
      _
    $region11: #{patch_embed.3} parent=1 // pred_check_branch
      %14 = sbr.rel (0) target = $region13
    $region12: #{patch_embed.3} parent=1 // pred_region
      _
    $region13: #{patch_embed.3} parent=1 // pred_fallthru
      _
    %v15 = vld [vmem:[%s0] sm:$0xff]
    %v16 = vld [vmem:[%s0 + $0x8] sm:$0xff]
    %v17 = vld [vmem:[%s0 + $0x10] sm:$0xff]
    %v18 = vld [vmem:[%s0 + $0x18] sm:$0xff]
    %v19 = vld [vmem:[%s0 + $0x20] sm:$0xff]
    %v20 = vld [vmem:[%s0 + $0x28] sm:$0xff]
    %v21 = vld [vmem:[%s0 + $0x30] sm:$0xff]
    %v22 = vld [vmem:[%s0 + $0x38] sm:$0xff]
    %v23 = vld [vmem:[%s0 + $0x40] sm:$0xff]
    %v24 = vld [vmem:[%s0 + $0x48] sm:$0xff]
    %v25 = vld [vmem:[%s0 + $0x50] sm:$0xff]
    %v26 = vld [vmem:[%s0 + $0x58] sm:$0xff]
    %v27 = vld [vmem:[%s0 + $0x60] sm:$0xff]
    %v28 = vld [vmem:[%s0 + $0x68] sm:$0xff]
    %v29 = vld [vmem:[%s0 + $0x70] sm:$0xff]
    %v30 = vld [vmem:[%s0 + $0x78] sm:$0xff]
    %v31 = vld [vmem:[%s0 + $0x80] sm:$0xff]
    %v32 = vld [vmem:[%s0 + $0x88] sm:$0xff]
    %v33 = vld [vmem:[%s0 + $0x90] sm:$0xff]
    %v34 = vld [vmem:[%s0 + $0x98] sm:$0xff]
    %v35 = vld [vmem:[%s0 + $0xa0] sm:$0xff]
    %v36 = vld [vmem:[%s0 + $0xa8] sm:$0xff]
    %v37 = vld [vmem:[%s0 + $0xb0] sm:$0xff]
    %v38 = vld [vmem:[%s0 + $0xb8] sm:$0xff]
    %v39 = vld [vmem:[%s0 + $0xc0] sm:$0xff]
    %v40 = vld [vmem:[%s0 + $0xc8] sm:$0xff]
    %v41 = vld [vmem:[%s0 + $0xd0] sm:$0xff]
    %v42 = vld [vmem:[%s0 + $0xd8] sm:$0xff]
    %v43 = vld [vmem:[%s0 + $0xe0] sm:$0xff]
    %v44 = vld [vmem:[%s0 + $0xe8] sm:$0xff]
    %v45 = vld [vmem:[%s0 + $0xf0] sm:$0xff]
    %v46 = vld [vmem:[%s0 + $0xf8] sm:$0xff]
    %vm47 = vcmask 523264
    %v48 = vsel %vm47, %v16, 0.0
    %v49 = vadd.f32 %v15, %v48
    %50 = vadd.xlane.f32.xlu0 %v49
    %v51 = vpop.xlane.xlu0 %50
    %v52 = vsel %vm47, %v18, 0.0
    %v53 = vadd.f32 %v17, %v52
    %54 = vadd.xlane.f32.xlu0 %v53
    %v55 = vpop.xlane.xlu0 %54
    %v56 = vsel %vm47, %v20, 0.0
    %v57 = vadd.f32 %v19, %v56
    %58 = vadd.xlane.f32.xlu0 %v57
    %v59 = vpop.xlane.xlu0 %58
    %v60 = vsel %vm47, %v22, 0.0
    %v61 = vadd.f32 %v21, %v60
    %62 = vadd.xlane.f32.xlu0 %v61
    %v63 = vpop.xlane.xlu0 %62
    %v64 = vsel %vm47, %v24, 0.0
    %v65 = vadd.f32 %v23, %v64
    %66 = vadd.xlane.f32.xlu0 %v65
    %v67 = vpop.xlane.xlu0 %66
    %v68 = vsel %vm47, %v26, 0.0
    %v69 = vadd.f32 %v25, %v68
    %70 = vadd.xlane.f32.xlu0 %v69
    %v71 = vpop.xlane.xlu0 %70
    %v72 = vsel %vm47, %v28, 0.0
    %v73 = vadd.f32 %v27, %v72
    %74 = vadd.xlane.f32.xlu0 %v73
    %v75 = vpop.xlane.xlu0 %74
    %v76 = vsel %vm47, %v30, 0.0
    %v77 = vadd.f32 %v29, %v76
    %78 = vadd.xlane.f32.xlu0 %v77
    %v79 = vpop.xlane.xlu0 %78
    %v80 = vsel %vm47, %v32, 0.0
    %v81 = vadd.f32 %v31, %v80
    %82 = vadd.xlane.f32.xlu0 %v81
    %v83 = vpop.xlane.xlu0 %82
    %v84 = vsel %vm47, %v34, 0.0
    %v85 = vadd.f32 %v33, %v84
    %86 = vadd.xlane.f32.xlu0 %v85
    %v87 = vpop.xlane.xlu0 %86
    %v88 = vsel %vm47, %v36, 0.0
    %v89 = vadd.f32 %v35, %v88
    %90 = vadd.xlane.f32.xlu0 %v89
    %v91 = vpop.xlane.xlu0 %90
    %v92 = vsel %vm47, %v38, 0.0
    %v93 = vadd.f32 %v37, %v92
    %94 = vadd.xlane.f32.xlu0 %v93
    %v95 = vpop.xlane.xlu0 %94
    %v96 = vsel %vm47, %v40, 0.0
    %v97 = vadd.f32 %v39, %v96
    %98 = vadd.xlane.f32.xlu0 %v97
    %v99 = vpop.xlane.xlu0 %98
    %v100 = vsel %vm47, %v42, 0.0
    %v101 = vadd.f32 %v41, %v100
    %102 = vadd.xlane.f32.xlu0 %v101
    %v103 = vpop.xlane.xlu0 %102
    %v104 = vsel %vm47, %v44, 0.0
    %v105 = vadd.f32 %v43, %v104
    %106 = vadd.xlane.f32.xlu0 %v105
    %v107 = vpop.xlane.xlu0 %106
    %v108 = vsel %vm47, %v46, 0.0
    %v109 = vadd.f32 %v45, %v108
    %110 = vadd.xlane.f32.xlu0 %v109
    %v111 = vpop.xlane.xlu0 %110
    %v112 = vrcp.pop 192.0
    %v113 = vmul.f32 %v51, %v112
    %v114 = vmul.f32 %v55, %v112
    %v115 = vmul.f32 %v59, %v112
    %v116 = vmul.f32 %v63, %v112
    %v117 = vmul.f32 %v67, %v112
    %v118 = vmul.f32 %v71, %v112
    %v119 = vmul.f32 %v75, %v112
    %v120 = vmul.f32 %v79, %v112
    %v121 = vmul.f32 %v83, %v112
    %v122 = vmul.f32 %v87, %v112
    %v123 = vmul.f32 %v91, %v112
    %v124 = vmul.f32 %v95, %v112
    %v125 = vmul.f32 %v99, %v112
    %v126 = vmul.f32 %v103, %v112
    %v127 = vmul.f32 %v107, %v112
    %v128 = vmul.f32 %v111, %v112
    %v129 = vsub.f32 %v15, %v113
    %v130 = vsub.f32 %v16, %v113
    %v131 = vsub.f32 %v17, %v114
    %v132 = vsub.f32 %v18, %v114
    %v133 = vsub.f32 %v19, %v115
    %v134 = vsub.f32 %v20, %v115
    %v135 = vsub.f32 %v21, %v116
    %v136 = vsub.f32 %v22, %v116
    %v137 = vsub.f32 %v23, %v117
    %v138 = vsub.f32 %v24, %v117
    %v139 = vsub.f32 %v25, %v118
    %v140 = vsub.f32 %v26, %v118
    %v141 = vsub.f32 %v27, %v119
    %v142 = vsub.f32 %v28, %v119
    %v143 = vsub.f32 %v29, %v120
    %v144 = vsub.f32 %v30, %v120
    %v145 = vsub.f32 %v31, %v121
    %v146 = vsub.f32 %v32, %v121
    %v147 = vsub.f32 %v33, %v122
    %v148 = vsub.f32 %v34, %v122
    %v149 = vsub.f32 %v35, %v123
    %v150 = vsub.f32 %v36, %v123
    %v151 = vsub.f32 %v37, %v124
    %v152 = vsub.f32 %v38, %v124
    %v153 = vsub.f32 %v39, %v125
    %v154 = vsub.f32 %v40, %v125
    %v155 = vsub.f32 %v41, %v126
    %v156 = vsub.f32 %v42, %v126
    %v157 = vsub.f32 %v43, %v127
    %v158 = vsub.f32 %v44, %v127
    %v159 = vsub.f32 %v45, %v128
    %v160 = vsub.f32 %v46, %v128
    %v161 = vmul.f32 %v129, %v129
    %v162 = vmul.f32 %v130, %v130
    %v163 = vmul.f32 %v131, %v131
    %v164 = vmul.f32 %v132, %v132
    %v165 = vmul.f32 %v133, %v133
    %v166 = vmul.f32 %v134, %v134
    %v167 = vmul.f32 %v135, %v135
    %v168 = vmul.f32 %v136, %v136
    %v169 = vmul.f32 %v137, %v137
    %v170 = vmul.f32 %v138, %v138
    %v171 = vmul.f32 %v139, %v139
    %v172 = vmul.f32 %v140, %v140
    %v173 = vmul.f32 %v141, %v141
    %v174 = vmul.f32 %v142, %v142
    %v175 = vmul.f32 %v143, %v143
    %v176 = vmul.f32 %v144, %v144
    %v177 = vmul.f32 %v145, %v145
    %v178 = vmul.f32 %v146, %v146
    %v179 = vmul.f32 %v147, %v147
    %v180 = vmul.f32 %v148, %v148
    %v181 = vmul.f32 %v149, %v149
    %v182 = vmul.f32 %v150, %v150
    %v183 = vmul.f32 %v151, %v151
    %v184 = vmul.f32 %v152, %v152
    %v185 = vmul.f32 %v153, %v153
    %v186 = vmul.f32 %v154, %v154
    %v187 = vmul.f32 %v155, %v155
    %v188 = vmul.f32 %v156, %v156
    %v189 = vmul.f32 %v157, %v157
    %v190 = vmul.f32 %v158, %v158
    %v191 = vmul.f32 %v159, %v159
    %v192 = vmul.f32 %v160, %v160
    %v193 = vsel %vm47, %v162, 0.0
    %v194 = vadd.f32 %v161, %v193
    %195 = vadd.xlane.f32.xlu0 %v194
    %v196 = vpop.xlane.xlu0 %195
    %v197 = vsel %vm47, %v164, 0.0
    %v198 = vadd.f32 %v163, %v197
    %199 = vadd.xlane.f32.xlu0 %v198
    %v200 = vpop.xlane.xlu0 %199
    %v201 = vsel %vm47, %v166, 0.0
    %v202 = vadd.f32 %v165, %v201
    %203 = vadd.xlane.f32.xlu0 %v202
    %v204 = vpop.xlane.xlu0 %203
    %v205 = vsel %vm47, %v168, 0.0
    %v206 = vadd.f32 %v167, %v205
    %207 = vadd.xlane.f32.xlu0 %v206
    %v208 = vpop.xlane.xlu0 %207
    %v209 = vsel %vm47, %v170, 0.0
    %v210 = vadd.f32 %v169, %v209
    %211 = vadd.xlane.f32.xlu0 %v210
    %v212 = vpop.xlane.xlu0 %211
    %v213 = vsel %vm47, %v172, 0.0
    %v214 = vadd.f32 %v171, %v213
    %215 = vadd.xlane.f32.xlu0 %v214
    %v216 = vpop.xlane.xlu0 %215
    %v217 = vsel %vm47, %v174, 0.0
    %v218 = vadd.f32 %v173, %v217
    %219 = vadd.xlane.f32.xlu0 %v218
    %v220 = vpop.xlane.xlu0 %219
    %v221 = vsel %vm47, %v176, 0.0
    %v222 = vadd.f32 %v175, %v221
    %223 = vadd.xlane.f32.xlu0 %v222
    %v224 = vpop.xlane.xlu0 %223
    %v225 = vsel %vm47, %v178, 0.0
    %v226 = vadd.f32 %v177, %v225
    %227 = vadd.xlane.f32.xlu0 %v226
    %v228 = vpop.xlane.xlu0 %227
    %v229 = vsel %vm47, %v180, 0.0
    %v230 = vadd.f32 %v179, %v229
    %231 = vadd.xlane.f32.xlu0 %v230
    %v232 = vpop.xlane.xlu0 %231
    %v233 = vsel %vm47, %v182, 0.0
    %v234 = vadd.f32 %v181, %v233
    %235 = vadd.xlane.f32.xlu0 %v234
    %v236 = vpop.xlane.xlu0 %235
    %v237 = vsel %vm47, %v184, 0.0
    %v238 = vadd.f32 %v183, %v237
    %239 = vadd.xlane.f32.xlu0 %v238
    %v240 = vpop.xlane.xlu0 %239
    %v241 = vsel %vm47, %v186, 0.0
    %v242 = vadd.f32 %v185, %v241
    %243 = vadd.xlane.f32.xlu0 %v242
    %v244 = vpop.xlane.xlu0 %243
    %v245 = vsel %vm47, %v188, 0.0
    %v246 = vadd.f32 %v187, %v245
    %247 = vadd.xlane.f32.xlu0 %v246
    %v248 = vpop.xlane.xlu0 %247
    %v249 = vsel %vm47, %v190, 0.0
    %v250 = vadd.f32 %v189, %v249
    %251 = vadd.xlane.f32.xlu0 %v250
    %v252 = vpop.xlane.xlu0 %251
    %v253 = vsel %vm47, %v192, 0.0
    %v254 = vadd.f32 %v191, %v253
    %255 = vadd.xlane.f32.xlu0 %v254
    %v256 = vpop.xlane.xlu0 %255
    %v257 = vmul.f32 %v196, %v112
    %v258 = vmul.f32 %v200, %v112
    %v259 = vmul.f32 %v204, %v112
    %v260 = vmul.f32 %v208, %v112
    %v261 = vmul.f32 %v212, %v112
    %v262 = vmul.f32 %v216, %v112
    %v263 = vmul.f32 %v220, %v112
    %v264 = vmul.f32 %v224, %v112
    %v265 = vmul.f32 %v228, %v112
    %v266 = vmul.f32 %v232, %v112
    %v267 = vmul.f32 %v236, %v112
    %v268 = vmul.f32 %v240, %v112
    %v269 = vmul.f32 %v244, %v112
    %v270 = vmul.f32 %v248, %v112
    %v271 = vmul.f32 %v252, %v112
    %v272 = vmul.f32 %v256, %v112
    %v273 = vadd.f32 %v257, 1e-05
    %v274 = vadd.f32 %v258, 1e-05
    %v275 = vadd.f32 %v259, 1e-05
    %v276 = vadd.f32 %v260, 1e-05
    %v277 = vadd.f32 %v261, 1e-05
    %v278 = vadd.f32 %v262, 1e-05
    %v279 = vadd.f32 %v263, 1e-05
    %v280 = vadd.f32 %v264, 1e-05
    %v281 = vadd.f32 %v265, 1e-05
    %v282 = vadd.f32 %v266, 1e-05
    %v283 = vadd.f32 %v267, 1e-05
    %v284 = vadd.f32 %v268, 1e-05
    %v285 = vadd.f32 %v269, 1e-05
    %v286 = vadd.f32 %v270, 1e-05
    %v287 = vadd.f32 %v271, 1e-05
    %v288 = vadd.f32 %v272, 1e-05
    %v289 = vrsqrt.pop %v273
    %v290 = vrsqrt.pop %v274
    %v291 = vrsqrt.pop %v275
    %v292 = vrsqrt.pop %v276
    %v293 = vrsqrt.pop %v277
    %v294 = vrsqrt.pop %v278
    %v295 = vrsqrt.pop %v279
    %v296 = vrsqrt.pop %v280
    %v297 = vrsqrt.pop %v281
    %v298 = vrsqrt.pop %v282
    %v299 = vrsqrt.pop %v283
    %v300 = vrsqrt.pop %v284
    %v301 = vrsqrt.pop %v285
    %v302 = vrsqrt.pop %v286
    %v303 = vrsqrt.pop %v287
    %v304 = vrsqrt.pop %v288
    %v305 = vmul.f32 %v129, %v289
    %v306 = vmul.f32 %v130, %v289
    %v307 = vmul.f32 %v131, %v290
    %v308 = vmul.f32 %v132, %v290
    %v309 = vmul.f32 %v133, %v291
    %v310 = vmul.f32 %v134, %v291
    %v311 = vmul.f32 %v135, %v292
    %v312 = vmul.f32 %v136, %v292
    %v313 = vmul.f32 %v137, %v293
    %v314 = vmul.f32 %v138, %v293
    %v315 = vmul.f32 %v139, %v294
    %v316 = vmul.f32 %v140, %v294
    %v317 = vmul.f32 %v141, %v295
    %v318 = vmul.f32 %v142, %v295
    %v319 = vmul.f32 %v143, %v296
    %v320 = vmul.f32 %v144, %v296
    %v321 = vmul.f32 %v145, %v297
    %v322 = vmul.f32 %v146, %v297
    %v323 = vmul.f32 %v147, %v298
    %v324 = vmul.f32 %v148, %v298
    %v325 = vmul.f32 %v149, %v299
    %v326 = vmul.f32 %v150, %v299
    %v327 = vmul.f32 %v151, %v300
    %v328 = vmul.f32 %v152, %v300
    %v329 = vmul.f32 %v153, %v301
    %v330 = vmul.f32 %v154, %v301
    %v331 = vmul.f32 %v155, %v302
    %v332 = vmul.f32 %v156, %v302
    %v333 = vmul.f32 %v157, %v303
    %v334 = vmul.f32 %v158, %v303
    %v335 = vmul.f32 %v159, %v304
    %v336 = vmul.f32 %v160, %v304
    %v337 = vld [vmem:[%s1] sm:$0x3]
    %v339 = vlaneseq
    %v340 = vshrl.u32 %v339, 7
    %v341 = vsub.s32 0, %v340
    %v342 = vrot.slane %v337, %v341
    %v343 = vlaneseq
    %v344 = vshrl.u32 %v343, 7
    %v345 = vsub.s32 1, %v344
    %v346 = vrot.slane %v337, %v345
    %v349 = vmul.f32 %v305, %v342
    %v350 = vmul.f32 %v306, %v346
    %v351 = vmul.f32 %v307, %v342
    %v352 = vmul.f32 %v308, %v346
    %v353 = vmul.f32 %v309, %v342
    %v354 = vmul.f32 %v310, %v346
    %v355 = vmul.f32 %v311, %v342
    %v356 = vmul.f32 %v312, %v346
    %v357 = vmul.f32 %v313, %v342
    %v358 = vmul.f32 %v314, %v346
    %v359 = vmul.f32 %v315, %v342
    %v360 = vmul.f32 %v316, %v346
    %v361 = vmul.f32 %v317, %v342
    %v362 = vmul.f32 %v318, %v346
    %v363 = vmul.f32 %v319, %v342
    %v364 = vmul.f32 %v320, %v346
    %v365 = vmul.f32 %v321, %v342
    %v366 = vmul.f32 %v322, %v346
    %v367 = vmul.f32 %v323, %v342
    %v368 = vmul.f32 %v324, %v346
    %v369 = vmul.f32 %v325, %v342
    %v370 = vmul.f32 %v326, %v346
    %v371 = vmul.f32 %v327, %v342
    %v372 = vmul.f32 %v328, %v346
    %v373 = vmul.f32 %v329, %v342
    %v374 = vmul.f32 %v330, %v346
    %v375 = vmul.f32 %v331, %v342
    %v376 = vmul.f32 %v332, %v346
    %v377 = vmul.f32 %v333, %v342
    %v378 = vmul.f32 %v334, %v346
    %v379 = vmul.f32 %v335, %v342
    %v380 = vmul.f32 %v336, %v346
    %v381 = vld [vmem:[%s2] sm:$0x3]
    %v383 = vlaneseq
    %v384 = vshrl.u32 %v383, 7
    %v385 = vsub.s32 0, %v384
    %v386 = vrot.slane %v381, %v385
    %v387 = vlaneseq
    %v388 = vshrl.u32 %v387, 7
    %v389 = vsub.s32 1, %v388
    %v390 = vrot.slane %v381, %v389
    %v393 = vadd.f32 %v349, %v386
    %v394 = vadd.f32 %v350, %v390
    %v395 = vadd.f32 %v351, %v386
    %v396 = vadd.f32 %v352, %v390
    %v397 = vadd.f32 %v353, %v386
    %v398 = vadd.f32 %v354, %v390
    %v399 = vadd.f32 %v355, %v386
    %v400 = vadd.f32 %v356, %v390
    %v401 = vadd.f32 %v357, %v386
    %v402 = vadd.f32 %v358, %v390
    %v403 = vadd.f32 %v359, %v386
    %v404 = vadd.f32 %v360, %v390
    %v405 = vadd.f32 %v361, %v386
    %v406 = vadd.f32 %v362, %v390
    %v407 = vadd.f32 %v363, %v386
    %v408 = vadd.f32 %v364, %v390
    %v409 = vadd.f32 %v365, %v386
    %v410 = vadd.f32 %v366, %v390
    %v411 = vadd.f32 %v367, %v386
    %v412 = vadd.f32 %v368, %v390
    %v413 = vadd.f32 %v369, %v386
    %v414 = vadd.f32 %v370, %v390
    %v415 = vadd.f32 %v371, %v386
    %v416 = vadd.f32 %v372, %v390
    %v417 = vadd.f32 %v373, %v386
    %v418 = vadd.f32 %v374, %v390
    %v419 = vadd.f32 %v375, %v386
    %v420 = vadd.f32 %v376, %v390
    %v421 = vadd.f32 %v377, %v386
    %v422 = vadd.f32 %v378, %v390
    %v423 = vadd.f32 %v379, %v386
    %v424 = vadd.f32 %v380, %v390
    %425 = vst [vmem:[#allocation2] sm:$0xff] %v393
    %426 = vst.msk [vmem:[#allocation2 + $0x8] sm:$0xff] %vm47, %v394
    %427 = vst [vmem:[#allocation2 + $0x10] sm:$0xff] %v395
    %428 = vst.msk [vmem:[#allocation2 + $0x18] sm:$0xff] %vm47, %v396
    %429 = vst [vmem:[#allocation2 + $0x20] sm:$0xff] %v397
    %430 = vst.msk [vmem:[#allocation2 + $0x28] sm:$0xff] %vm47, %v398
    %431 = vst [vmem:[#allocation2 + $0x30] sm:$0xff] %v399
    %432 = vst.msk [vmem:[#allocation2 + $0x38] sm:$0xff] %vm47, %v400
    %433 = vst [vmem:[#allocation2 + $0x40] sm:$0xff] %v401
    %434 = vst.msk [vmem:[#allocation2 + $0x48] sm:$0xff] %vm47, %v402
    %435 = vst [vmem:[#allocation2 + $0x50] sm:$0xff] %v403
    %436 = vst.msk [vmem:[#allocation2 + $0x58] sm:$0xff] %vm47, %v404
    %437 = vst [vmem:[#allocation2 + $0x60] sm:$0xff] %v405
    %438 = vst.msk [vmem:[#allocation2 + $0x68] sm:$0xff] %vm47, %v406
    %439 = vst [vmem:[#allocation2 + $0x70] sm:$0xff] %v407
    %440 = vst.msk [vmem:[#allocation2 + $0x78] sm:$0xff] %vm47, %v408
    %441 = vst [vmem:[#allocation2 + $0x80] sm:$0xff] %v409
    %442 = vst.msk [vmem:[#allocation2 + $0x88] sm:$0xff] %vm47, %v410
    %443 = vst [vmem:[#allocation2 + $0x90] sm:$0xff] %v411
    %444 = vst.msk [vmem:[#allocation2 + $0x98] sm:$0xff] %vm47, %v412
    %445 = vst [vmem:[#allocation2 + $0xa0] sm:$0xff] %v413
    %446 = vst.msk [vmem:[#allocation2 + $0xa8] sm:$0xff] %vm47, %v414
    %447 = vst [vmem:[#allocation2 + $0xb0] sm:$0xff] %v415
    %448 = vst.msk [vmem:[#allocation2 + $0xb8] sm:$0xff] %vm47, %v416
    %449 = vst [vmem:[#allocation2 + $0xc0] sm:$0xff] %v417
    %450 = vst.msk [vmem:[#allocation2 + $0xc8] sm:$0xff] %vm47, %v418
    %451 = vst [vmem:[#allocation2 + $0xd0] sm:$0xff] %v419
    %452 = vst.msk [vmem:[#allocation2 + $0xd8] sm:$0xff] %vm47, %v420
    %453 = vst [vmem:[#allocation2 + $0xe0] sm:$0xff] %v421
    %454 = vst.msk [vmem:[#allocation2 + $0xe8] sm:$0xff] %vm47, %v422
    %455 = vst [vmem:[#allocation2 + $0xf0] sm:$0xff] %v423
    %456 = vst.msk [vmem:[#allocation2 + $0xf8] sm:$0xff] %vm47, %v424
    // Predicated region
    $region14: #{patch_embed.3} parent=1 // pred_check
      _
    $region15: #{patch_embed.3} parent=1 // pred_check_branch
      %458 = sbr.rel (0) target = $region17
    $region16: #{patch_embed.3} parent=1 // pred_region
      %s460 = ssub.s32 4096, 4096
      %461 = vsyncadd [#allocation3], %s460
      %s462 = sshll.u32 [#allocation2], 4
      %s463 = int_to_ptr.vmem [resolvable:$true] %s462
      %468 = dma.vmem_to_hbm [thread:$0]  %s463, 4096, %s3, [#allocation3], 256, 256, 16
    $region17: #{patch_embed.3} parent=1 // pred_fallthru
      _
    // Predicated region
    $region18: #{patch_embed.3} parent=1 // pred_check
      _
    $region19: #{patch_embed.3} parent=1 // pred_check_branch
      %470 = sbr.rel (0) target = $region21
    $region20: #{patch_embed.3} parent=1 // pred_region
      %471 = dma.done [#allocation3], 4096
    $region21: #{patch_embed.3} parent=1 // pred_fallthru
      _
    %472 = vsyncpa [#allocation3], 1

// kernel: patch_embed.2
$region0: #{patch_embed.2}
  #allocation0 [shape = 'u32[]', space=smem, size = 0x4, offset = 0x4, fixed_abs, tag = 'smem constant byte address 0x4 - core index']
  #allocation1 [shape = 'u32[144,128]{1,0:T(1,128)}', space=vmem, size = 0x12000, scoped, tag = 'internal scratch']
  %s0 = inlined_call_operand.vmem [shape: bf16[128,48], index: 0, kind: input, shape index: {}]
  %s1 = inlined_call_operand.vmem [shape: bf16[48,256], index: 1, kind: input, shape index: {}]
  %s2 = inlined_call_operand.vmem [shape: f32[1,256], index: 2, kind: input, shape index: {}]
  %s3 = inlined_call_operand.vmem [shape: f32[128,256], index: 3, kind: output, shape index: {}]
  %s4 = sld [smem:[#allocation0]]
  $region22: #{patch_embed.2} parent=0
    _
  %s6 = ssub.s32 1, %s4
  %s7 = scalar_select 0, %s6, %s4
  // Predicated region
  $region2: #{patch_embed.2} parent=0 // pred_check
    _
  $region3: #{patch_embed.2} parent=0 // pred_check_branch
    %9 = sbr.rel (0) target = $region5
  $region4: #{patch_embed.2} parent=0 // pred_region
    _
  $region5: #{patch_embed.2} parent=0 // pred_fallthru
    _
  // Predicated region
  $region6: #{patch_embed.2} parent=0 // pred_check
    _
  $region7: #{patch_embed.2} parent=0 // pred_check_branch
    %11 = sbr.rel (0) target = $region9
  $region8: #{patch_embed.2} parent=0 // pred_region
    _
  $region9: #{patch_embed.2} parent=0 // pred_fallthru
    _
  // Predicated region
  $region10: #{patch_embed.2} parent=0 // pred_check
    _
  $region11: #{patch_embed.2} parent=0 // pred_check_branch
    %13 = sbr.rel (0) target = $region13
  $region12: #{patch_embed.2} parent=0 // pred_region
    _
  $region13: #{patch_embed.2} parent=0 // pred_fallthru
    _
  %v15 = vld [vmem:[%s0] sm:$0xf]
  %v16 = vld [vmem:[%s0 + $0x4] sm:$0xf]
  %v17 = vld [vmem:[%s0 + $0x8] sm:$0xf]
  %v18 = vld [vmem:[%s0 + $0xc] sm:$0xf]
  %v19 = vld [vmem:[%s0 + $0x10] sm:$0xf]
  %v20 = vld [vmem:[%s0 + $0x14] sm:$0xf]
  %v21 = vld [vmem:[%s0 + $0x18] sm:$0xf]
  %v22 = vld [vmem:[%s0 + $0x1c] sm:$0xf]
  %v23 = vld [vmem:[%s0 + $0x20] sm:$0xf]
  %v24 = vld [vmem:[%s0 + $0x24] sm:$0xf]
  %v25 = vld [vmem:[%s0 + $0x28] sm:$0xf]
  %v26 = vld [vmem:[%s0 + $0x2c] sm:$0xf]
  %v27 = vld [vmem:[%s0 + $0x30] sm:$0xf]
  %v28 = vld [vmem:[%s0 + $0x34] sm:$0xf]
  %v29 = vld [vmem:[%s0 + $0x38] sm:$0xf]
  %v30 = vld [vmem:[%s0 + $0x3c] sm:$0xf]
  %v31 = vld [vmem:[%s1] sm:$0xff]
  %v32 = vld [vmem:[%s1 + $0x8] sm:$0xff]
  %v33 = vld [vmem:[%s1 + $0x10] sm:$0xff]
  %v34 = vld [vmem:[%s1 + $0x18] sm:$0xff]
  %v35 = vld [vmem:[%s1 + $0x20] sm:$0xff]
  %v36 = vld [vmem:[%s1 + $0x28] sm:$0xff]
  %v37 = vld [vmem:[%s2] sm:$0x3]
  %v39 = vlaneseq
  %v40 = vshrl.u32 %v39, 7
  %v41 = vsub.s32 0, %v40
  %v42 = vrot.slane %v37, %v41
  %v43 = vlaneseq
  %v44 = vshrl.u32 %v43, 7
  %v45 = vsub.s32 1, %v44
  %v46 = vrot.slane %v37, %v45
  %v65 = vunpack.c.l.b16 %v15
  %v66 = vunpack.c.l.b16 %v16
  %v67 = vunpack.c.l.b16 %v17
  %v68 = vunpack.c.l.b16 %v18
  %v69 = vunpack.c.l.b16 %v19
  %v70 = vunpack.c.l.b16 %v20
  %v71 = vunpack.c.l.b16 %v21
  %v72 = vunpack.c.l.b16 %v22
  %v73 = vunpack.c.l.b16 %v23
  %v74 = vunpack.c.l.b16 %v24
  %v75 = vunpack.c.l.b16 %v25
  %v76 = vunpack.c.l.b16 %v26
  %v77 = vunpack.c.l.b16 %v27
  %v78 = vunpack.c.l.b16 %v28
  %v79 = vunpack.c.l.b16 %v29
  %v80 = vunpack.c.l.b16 %v30
  %v81 = vpack.c.b16 %v66, %v65
  %v82 = vpack.c.b16 %v68, %v67
  %v83 = vpack.c.b16 %v70, %v69
  %v84 = vpack.c.b16 %v72, %v71
  %v85 = vpack.c.b16 %v74, %v73
  %v86 = vpack.c.b16 %v76, %v75
  %v87 = vpack.c.b16 %v78, %v77
  %v88 = vpack.c.b16 %v80, %v79
  %v95 = vunpack.c.l.b16 %v31
  %v96 = vunpack.c.h.b16 %v31
  %v97 = vunpack.c.l.b16 %v32
  %v98 = vunpack.c.h.b16 %v32
  %v99 = vunpack.c.l.b16 %v33
  %v100 = vunpack.c.h.b16 %v33
  %v101 = vunpack.c.l.b16 %v34
  %v102 = vunpack.c.h.b16 %v34
  %v103 = vunpack.c.l.b16 %v35
  %v104 = vunpack.c.h.b16 %v35
  %v105 = vunpack.c.l.b16 %v36
  %v106 = vunpack.c.h.b16 %v36
  %v107 = vpack.c.b16 %v97, %v95
  %v108 = vpack.c.b16 %v98, %v96
  %v109 = vpack.c.b16 %v101, %v99
  %v110 = vpack.c.b16 %v102, %v100
  %v111 = vpack.c.b16 %v105, %v103
  %v112 = vpack.c.b16 %v106, %v104
  %vm119 = vcmask 392192
  %v121 = vsel %vm119, %v81, 0
  %v124 = vsel %vm119, %v82, 0
  %v127 = vsel %vm119, %v83, 0
  %v130 = vsel %vm119, %v84, 0
  %v133 = vsel %vm119, %v85, 0
  %v136 = vsel %vm119, %v86, 0
  %v139 = vsel %vm119, %v87, 0
  %v142 = vsel %vm119, %v88, 0
  %144 = vmatprep.subr.bf16.mxu0 %v108
  %145 = vmatpush1.bf16.msra.mxu0 %v107
  %146 = vmatprep.subr.bf16.mxu0 %v110
  %147 = vmatpush1.bf16.msra.mxu0 %v109
  %148 = vmatprep.subr.bf16.mxu0 %v112
  %149 = vmatpush1.bf16.msra.mxu0 %v111
  %150 = vmatprep.subr.bf16.mxu0 0
  %151 = vmatpush1.bf16.msra.mxu0 0
  %152 = vmatprep.subr.bf16.mxu0 0
  %153 = vmatpush1.bf16.msra.mxu0 0
  %154 = vmatprep.subr.bf16.mxu0 0
  %155 = vmatpush1.bf16.msra.mxu0 0
  %156 = vmatprep.subr.bf16.mxu0 0
  %157 = vmatpush1.bf16.msra.mxu0 0
  %158 = vmatprep.subr.bf16.mxu0 0
  %159 = vmatpush1.bf16.msra.mxu0 0
  %160 = vmatprep.subr.bf16.mxu0 0
  %161 = vmatpush1.bf16.msra.mxu0 0
  %162 = vmatprep.subr.bf16.mxu0 0
  %163 = vmatpush1.bf16.msra.mxu0 0
  %164 = vmatprep.subr.bf16.mxu0 0
  %165 = vmatpush1.bf16.msra.mxu0 0
  %166 = vmatprep.subr.bf16.mxu0 0
  %167 = vmatpush1.bf16.msra.mxu0 0
  %168 = vmatprep.subr.bf16.mxu0 0
  %169 = vmatpush1.bf16.msra.mxu0 0
  %170 = vmatprep.subr.bf16.mxu0 0
  %171 = vmatpush1.bf16.msra.mxu0 0
  %172 = vmatprep.subr.bf16.mxu0 0
  %173 = vmatpush1.bf16.msra.mxu0 0
  %174 = vmatprep.subr.bf16.mxu0 0
  %175 = vmatpush1.bf16.msra.mxu0 0
  %176 = vmatprep.mubr.bf16.mxu0 0
  %177 = vmatmul.mubr.bf16.gmra.mrb[0].mxu0 %v121
  %v178 = vpop.f32.mrb[0].mxu0
  %v179 = vadd.f32 %v42, %v178
  %v180 = vpop.f32.mrb[0].mxu0
  %v181 = vadd.f32 %v46, %v180
  %v182 = vpop.f32.mrb[0].mxu0
  %v183 = vadd.f32 %v42, %v182
  %v184 = vpop.f32.mrb[0].mxu0
  %v185 = vadd.f32 %v46, %v184
  %186 = vmatprep.mubr.bf16.mxu0 0
  %187 = vmatmul.mubr.bf16.gmra.mrb[0].mxu0 %v124
  %v188 = vpop.f32.mrb[0].mxu0
  %v189 = vadd.f32 %v42, %v188
  %v190 = vpop.f32.mrb[0].mxu0
  %v191 = vadd.f32 %v46, %v190
  %v192 = vpop.f32.mrb[0].mxu0
  %v193 = vadd.f32 %v42, %v192
  %v194 = vpop.f32.mrb[0].mxu0
  %v195 = vadd.f32 %v46, %v194
  %196 = vmatprep.mubr.bf16.mxu0 0
  %197 = vmatmul.mubr.bf16.gmra.mrb[0].mxu0 %v127
  %v198 = vpop.f32.mrb[0].mxu0
  %v199 = vadd.f32 %v42, %v198
  %v200 = vpop.f32.mrb[0].mxu0
  %v201 = vadd.f32 %v46, %v200
  %v202 = vpop.f32.mrb[0].mxu0
  %v203 = vadd.f32 %v42, %v202
  %v204 = vpop.f32.mrb[0].mxu0
  %v205 = vadd.f32 %v46, %v204
  %206 = vmatprep.mubr.bf16.mxu0 0
  %207 = vmatmul.mubr.bf16.gmra.mrb[0].mxu0 %v130
  %v208 = vpop.f32.mrb[0].mxu0
  %v209 = vadd.f32 %v42, %v208
  %v210 = vpop.f32.mrb[0].mxu0
  %v211 = vadd.f32 %v46, %v210
  %v212 = vpop.f32.mrb[0].mxu0
  %v213 = vadd.f32 %v42, %v212
  %v214 = vpop.f32.mrb[0].mxu0
  %v215 = vadd.f32 %v46, %v214
  %216 = vmatprep.mubr.bf16.mxu0 0
  %217 = vmatmul.mubr.bf16.gmra.mrb[0].mxu0 %v133
  %v218 = vpop.f32.mrb[0].mxu0
  %v219 = vadd.f32 %v42, %v218
  %v220 = vpop.f32.mrb[0].mxu0
  %v221 = vadd.f32 %v46, %v220
  %v222 = vpop.f32.mrb[0].mxu0
  %v223 = vadd.f32 %v42, %v222
  %v224 = vpop.f32.mrb[0].mxu0
  %v225 = vadd.f32 %v46, %v224
  %226 = vmatprep.mubr.bf16.mxu0 0
  %227 = vmatmul.mubr.bf16.gmra.mrb[0].mxu0 %v136
  %v228 = vpop.f32.mrb[0].mxu0
  %v229 = vadd.f32 %v42, %v228
  %v230 = vpop.f32.mrb[0].mxu0
  %v231 = vadd.f32 %v46, %v230
  %v232 = vpop.f32.mrb[0].mxu0
  %v233 = vadd.f32 %v42, %v232
  %v234 = vpop.f32.mrb[0].mxu0
  %v235 = vadd.f32 %v46, %v234
  %236 = vmatprep.mubr.bf16.mxu0 0
  %237 = vmatmul.mubr.bf16.gmra.mrb[0].mxu0 %v139
  %v238 = vpop.f32.mrb[0].mxu0
  %v239 = vadd.f32 %v42, %v238
  %v240 = vpop.f32.mrb[0].mxu0
  %v241 = vadd.f32 %v46, %v240
  %v242 = vpop.f32.mrb[0].mxu0
  %v243 = vadd.f32 %v42, %v242
  %v244 = vpop.f32.mrb[0].mxu0
  %v245 = vadd.f32 %v46, %v244
  %246 = vmatprep.mubr.bf16.mxu0 0
  %247 = vmatmul.mubr.bf16.gmra.mrb[0].mxu0 %v142
  %v248 = vpop.f32.mrb[0].mxu0
  %v249 = vadd.f32 %v42, %v248
  %v250 = vpop.f32.mrb[0].mxu0
  %v251 = vadd.f32 %v46, %v250
  %v252 = vpop.f32.mrb[0].mxu0
  %v253 = vadd.f32 %v42, %v252
  %v254 = vpop.f32.mrb[0].mxu0
  %v255 = vadd.f32 %v46, %v254
  %256 = vdwg.mxu0
  %257 = vst [vmem:[%s3] sm:$0xff] %v179
  %258 = vst [vmem:[%s3 + $0x8] sm:$0xff] %v181
  %259 = vst [vmem:[%s3 + $0x10] sm:$0xff] %v183
  %260 = vst [vmem:[%s3 + $0x18] sm:$0xff] %v185
  %261 = vst [vmem:[%s3 + $0x20] sm:$0xff] %v189
  %262 = vst [vmem:[%s3 + $0x28] sm:$0xff] %v191
  %263 = vst [vmem:[%s3 + $0x30] sm:$0xff] %v193
  %264 = vst [vmem:[%s3 + $0x38] sm:$0xff] %v195
  %265 = vst [vmem:[%s3 + $0x40] sm:$0xff] %v199
  %266 = vst [vmem:[%s3 + $0x48] sm:$0xff] %v201
  %267 = vst [vmem:[%s3 + $0x50] sm:$0xff] %v203
  %268 = vst [vmem:[%s3 + $0x58] sm:$0xff] %v205
  %269 = vst [vmem:[%s3 + $0x60] sm:$0xff] %v209
  %270 = vst [vmem:[%s3 + $0x68] sm:$0xff] %v211
  %271 = vst [vmem:[%s3 + $0x70] sm:$0xff] %v213
  %272 = vst [vmem:[%s3 + $0x78] sm:$0xff] %v215
  %273 = vst [vmem:[%s3 + $0x80] sm:$0xff] %v219
  %274 = vst [vmem:[%s3 + $0x88] sm:$0xff] %v221
  %275 = vst [vmem:[%s3 + $0x90] sm:$0xff] %v223
  %276 = vst [vmem:[%s3 + $0x98] sm:$0xff] %v225
  %277 = vst [vmem:[%s3 + $0xa0] sm:$0xff] %v229
  %278 = vst [vmem:[%s3 + $0xa8] sm:$0xff] %v231
  %279 = vst [vmem:[%s3 + $0xb0] sm:$0xff] %v233
  %280 = vst [vmem:[%s3 + $0xb8] sm:$0xff] %v235
  %281 = vst [vmem:[%s3 + $0xc0] sm:$0xff] %v239
  %282 = vst [vmem:[%s3 + $0xc8] sm:$0xff] %v241
  %283 = vst [vmem:[%s3 + $0xd0] sm:$0xff] %v243
  %284 = vst [vmem:[%s3 + $0xd8] sm:$0xff] %v245
  %285 = vst [vmem:[%s3 + $0xe0] sm:$0xff] %v249
  %286 = vst [vmem:[%s3 + $0xe8] sm:$0xff] %v251
  %287 = vst [vmem:[%s3 + $0xf0] sm:$0xff] %v253
  %288 = vst [vmem:[%s3 + $0xf8] sm:$0xff] %v255
  // Predicated region
  $region14: #{patch_embed.2} parent=0 // pred_check
    _
  $region15: #{patch_embed.2} parent=0 // pred_check_branch
    %290 = sbr.rel (0) target = $region17
  $region16: #{patch_embed.2} parent=0 // pred_region
    _
  $region17: #{patch_embed.2} parent=0 // pred_fallthru
    _
  // Predicated region
  $region18: #{patch_embed.2} parent=0 // pred_check
    _
  $region19: #{patch_embed.2} parent=0 // pred_check_branch
    %292 = sbr.rel (0) target = $region21
  $region20: #{patch_embed.2} parent=0 // pred_region
    _
  $region21: #{patch_embed.2} parent=0 // pred_fallthru
    _

</llo_original>
